<compile_context>
chip_gen: v7x
topology: tpu7x:2x2x1
jax: 0.10.0
libtpu: 0.0.40
codegen_flags: <defaults>
</compile_context>

<pallas_src>
import jax
import jax.numpy as jnp
from jax.experimental import pallas as pl
from jax.experimental.pallas import tpu as pltpu


def _round_up(x, m):
    return ((x + m - 1) // m) * m


def generator_kernel(x_ref, w_ref, b_ref, o_ref, m_ref, l_ref):
    # x_ref: (tm, D) bf16    w_ref: (D, tn) bf16    b_ref: (1, tn) f32
    # o_ref: (tm, V_pad) f32 (resident across the vocab axis)
    # m_ref / l_ref: (tm, 1) f32 running max / rescaled sum-of-exp
    j = pl.program_id(1)
    tn = w_ref.shape[1]

    @pl.when(j == 0)
    def _init():
        m_ref[...] = jnp.full_like(m_ref, -jnp.inf)
        l_ref[...] = jnp.zeros_like(l_ref)

    # MXU matmul (bf16 in, f32 accumulate) + f32 bias.
    logits = jnp.dot(
        x_ref[...], w_ref[...], preferred_element_type=jnp.float32
    ) + b_ref[...]

    # Stream raw f32 logits straight into the resident output block
    # (lane-aligned dynamic slice; tn is a multiple of 128).
    col0 = pl.multiple_of(j * tn, 128)
    o_ref[:, pl.ds(col0, tn)] = logits

    # Online (running) max / rescaled sum-of-exp update, all in f32.
    blk_max = jnp.max(logits, axis=-1, keepdims=True)
    m_new = jnp.maximum(m_ref[...], blk_max)
    l_ref[...] = (
        l_ref[...] * jnp.exp(m_ref[...] - m_new)
        + jnp.sum(jnp.exp(logits - m_new), axis=-1, keepdims=True)
    )
    m_ref[...] = m_new

    @pl.when(j == pl.num_programs(1) - 1)
    def _finalize():
        norm = m_ref[...] + jnp.log(l_ref[...])   # (tm, 1) = logZ per row
        o_ref[...] = o_ref[...] - norm            # single vectorized subtract


def prepare_generator_params(weight, bias, *, tile_n=2048):
    """One-time parameter prep (hoisted out of the per-call forward).

    weight: [d_model, vocab] (transposed vs nn.Linear's [out, in]); bias: [vocab].
    Casts the weight to bf16 and pads the vocab axis to a multiple of the lane
    tile; padded bias columns get -1e30 so they vanish from the softmax.
    """
    D, V = weight.shape
    tn = min(tile_n, _round_up(V, 128))
    nv = pl.cdiv(V, tn)
    V_pad = nv * tn

    w = weight.astype(jnp.bfloat16)
    b = bias.reshape(1, V).astype(jnp.float32)
    if V_pad != V:
        w = jnp.pad(w, ((0, 0), (0, V_pad - V)))
        b = jnp.pad(b, ((0, 0), (0, V_pad - V)), constant_values=-1e30)
    return w, b, tn, V


def generator_forward(x, w_pad, b_pad, tn, vocab, *,
                      tile_m=512, vmem_budget_bytes=48 * 1024 * 1024):
    """log_softmax(x @ W + b, axis=-1) with W/b from prepare_generator_params.

    x: [B, S, d_model]. Returns [B, S, vocab] (f32 math; cast to x.dtype).
    """
    B, S, D = x.shape
    V_pad = w_pad.shape[1]
    V = vocab
    M = B * S
    nv = V_pad // tn

    # Row tile: multiple of 8 (sublane), shrunk until the VMEM estimate fits
    # the budget (resident f32 out + double-buffered x/W/b + scratch).
    tm = _round_up(min(tile_m, _round_up(M, 8)), 8)

    def _vmem_bytes(tm_):
        return (tm_ * V_pad * 4          # resident f32 output block
                + 2 * tm_ * D * 2        # x rows, double-buffered bf16
                + 2 * D * tn * 2         # weight tile, double-buffered bf16
                + 2 * tn * 4             # bias tile, double-buffered f32
                + 4 * tm_ * 4)           # m/l scratch

    headroom = 4 * 1024 * 1024
    while tm > 8 and _vmem_bytes(tm) > vmem_budget_bytes - headroom:
        tm = max(8, _round_up(tm // 2, 8))

    n_rows = pl.cdiv(M, tm)
    M_pad = n_rows * tm

    x2d = x.reshape(M, D).astype(jnp.bfloat16)
    if M_pad != M:
        x2d = jnp.pad(x2d, ((0, M_pad - M), (0, 0)))

    # Weight/bias are re-streamed once per row block -> count them n_rows times.
    cost = pl.CostEstimate(
        flops=2 * M_pad * D * V_pad,
        transcendentals=M_pad * V_pad,
        bytes_accessed=(
            x2d.size * 2
            + n_rows * (w_pad.size * 2 + b_pad.size * 4)
            + M_pad * V_pad * 4
        ),
    )

    vmem_limit = min(max(_vmem_bytes(tm) + headroom, 32 * 1024 * 1024),
                     100 * 1024 * 1024)

    out2d = pl.pallas_call(
        generator_kernel,
        out_shape=jax.ShapeDtypeStruct((M_pad, V_pad), jnp.float32),
        grid_spec=pltpu.PrefetchScalarGridSpec(
            num_scalar_prefetch=0,
            grid=(n_rows, nv),
            in_specs=[
                pl.BlockSpec((tm, D), lambda i, j: (i, 0)),   # x rows (resident over vocab)
                pl.BlockSpec((D, tn), lambda i, j: (0, j)),   # weight vocab tile (streamed)
                pl.BlockSpec((1, tn), lambda i, j: (0, j)),   # bias vocab tile
            ],
            out_specs=pl.BlockSpec((tm, V_pad), lambda i, j: (i, 0)),  # resident output
            scratch_shapes=[
                pltpu.VMEM((tm, 1), jnp.float32),   # running row max
                pltpu.VMEM((tm, 1), jnp.float32),   # running sum of exp
            ],
        ),
        compiler_params=pltpu.CompilerParams(
            dimension_semantics=("parallel", "arbitrary"),
            vmem_limit_bytes=vmem_limit,
        ),
        cost_estimate=cost,
    )(x2d, w_pad, b_pad)

    out = out2d[:M, :V].reshape(B, S, V)
    if x.dtype != jnp.float32:
        out = out.astype(x.dtype)
    return out


if __name__ == "__main__":
    # Deliberately ragged small shapes: M = 2*7 = 14 (row padding), V = 500
    # (vocab padding), tile_n=128 -> 4 vocab blocks exercising the online path.
    B, S, d_model, vocab = 2, 7, 32, 500

    key = jax.random.PRNGKey(0)
    kx, kw, kb = jax.random.split(key, 3)

    # Mimic nn.Linear's uniform(-1/sqrt(in), 1/sqrt(in)) init.
    bound = 1.0 / (d_model ** 0.5)
    weight = jax.random.uniform(kw, (d_model, vocab), jnp.float32, -bound, bound)
    bias = jax.random.uniform(kb, (vocab,), jnp.float32, -bound, bound)
    x = jax.random.normal(kx, (B, S, d_model), jnp.float32)

    # One-time parameter prep (cast + pad hoisted out of the forward).
    w_pad, b_pad, tn, V = prepare_generator_params(weight, bias, tile_n=128)

    out = generator_forward(x, w_pad, b_pad, tn, V)
    out = jax.block_until_ready(out)

    # Reference with the same bf16 matmul / f32 accumulation as the kernel.
    logits_ref = jnp.dot(
        x.astype(jnp.bfloat16), weight.astype(jnp.bfloat16),
        preferred_element_type=jnp.float32,
    ) + bias
    ref = jax.nn.log_softmax(logits_ref, axis=-1)

    assert out.shape == (B, S, vocab)
    assert jnp.allclose(out, ref, atol=1e-3, rtol=1e-3), float(
        jnp.max(jnp.abs(out - ref))
    )

    print("KERNEL_OK")
</pallas_src>

<mosaic_0001>
module attributes {stable_mosaic.version = 11 : i64} {
  func.func @generator_kernel(%arg0: i32, %arg1: i32, %arg2: memref<16x32xbf16, #tpu.memory_space<vmem>>, %arg3: memref<32x128xbf16, #tpu.memory_space<vmem>>, %arg4: memref<1x128xf32, #tpu.memory_space<vmem>>, %arg5: memref<16x512xf32, #tpu.memory_space<vmem>>, %arg6: memref<16x1xf32, #tpu.memory_space<vmem>>, %arg7: memref<16x1xf32, #tpu.memory_space<vmem>>) attributes {dimension_semantics = [#tpu.dimension_semantics<parallel>, #tpu.dimension_semantics<arbitrary>], iteration_bounds = array<i64: 1, 4>, scalar_prefetch = 0 : i64, scratch_operands = 2 : i64, tpu.core_type = #tpu.core_type<tc>, window_params = [{transform_indices = @transform_0, window_bounds = array<i64: 16, 32>}, {transform_indices = @transform_1, window_bounds = array<i64: 32, 128>}, {transform_indices = @transform_2, window_bounds = array<i64: 1, 128>}, {transform_indices = @transform_3, window_bounds = array<i64: 16, 512>}]} {
    %c0_i32 = arith.constant 0 : i32
    %0 = arith.cmpi eq, %arg1, %c0_i32 : i32
    %1 = arith.extui %0 : i1 to i32
    %c0_i32_0 = arith.constant 0 : i32
    %2 = arith.cmpi ne, %1, %c0_i32_0 : i32
    scf.if %2 {
      %cst_20 = arith.constant 0xFF800000 : f32
      %33 = vector.broadcast %cst_20 : f32 to vector<16x1xf32>
      %c0_21 = arith.constant 0 : index
      %c0_22 = arith.constant 0 : index
      %34 = vector.load %arg6[%c0_21, %c0_22] : memref<16x1xf32, #tpu.memory_space<vmem>>, vector<16x1xf32>
      tpu.vector_store %arg6[%c0_21, %c0_22], %33 {strides = array<i32>} : memref<16x1xf32, #tpu.memory_space<vmem>>, vector<16x1xf32>,
      %cst_23 = arith.constant 0.000000e+00 : f32
      %35 = vector.broadcast %cst_23 : f32 to vector<16x1xf32>
      %c0_24 = arith.constant 0 : index
      %c0_25 = arith.constant 0 : index
      %36 = vector.load %arg7[%c0_24, %c0_25] : memref<16x1xf32, #tpu.memory_space<vmem>>, vector<16x1xf32>
      tpu.vector_store %arg7[%c0_24, %c0_25], %35 {strides = array<i32>} : memref<16x1xf32, #tpu.memory_space<vmem>>, vector<16x1xf32>,
    } else {
    }
    %c0 = arith.constant 0 : index
    %c0_1 = arith.constant 0 : index
    %3 = vector.load %arg2[%c0, %c0_1] : memref<16x32xbf16, #tpu.memory_space<vmem>>, vector<16x32xbf16>
    %c0_2 = arith.constant 0 : index
    %c0_3 = arith.constant 0 : index
    %4 = vector.load %arg3[%c0_2, %c0_3] : memref<32x128xbf16, #tpu.memory_space<vmem>>, vector<32x128xbf16>
    %cst = arith.constant dense<0.000000e+00> : vector<16x128xf32>
    %5 = tpu.matmul %3, %4, %cst {dimension_numbers = #tpu.dot_dimension_numbers<[1], [0], [0], [1], [0, 0, 1, 1], [], []>} : vector<16x32xbf16>, vector<32x128xbf16>, vector<16x128xf32> -> vector<16x128xf32>
    %c0_4 = arith.constant 0 : index
    %c0_5 = arith.constant 0 : index
    %6 = vector.load %arg4[%c0_4, %c0_5] : memref<1x128xf32, #tpu.memory_space<vmem>>, vector<1x128xf32>
    %7 = vector.broadcast %6 : vector<1x128xf32> to vector<16x128xf32>
    %8 = arith.addf %5, %7 : vector<16x128xf32>
    %c128_i32 = arith.constant 128 : i32
    %9 = arith.muli %arg1, %c128_i32 : i32
    %10 = tpu.assume_multiple %9, 128 : i32
    %c0_6 = arith.constant 0 : index
    %11 = arith.index_cast %10 : i32 to index
    %12 = vector.load %arg5[%c0_6, %11] : memref<16x512xf32, #tpu.memory_space<vmem>>, vector<16x128xf32>
    tpu.vector_store %arg5[%c0_6, %11], %8 {strides = array<i32>} : memref<16x512xf32, #tpu.memory_space<vmem>>, vector<16x128xf32>,
    %cst_7 = arith.constant dense<0xFF800000> : vector<16xf32>
    %13 = vector.multi_reduction <maximumf>, %8, %cst_7 [1] : vector<16x128xf32> to vector<16xf32>
    %14 = vector.shape_cast %13 : vector<16xf32> to vector<16x1xf32>
    %c0_8 = arith.constant 0 : index
    %c0_9 = arith.constant 0 : index
    %15 = vector.load %arg6[%c0_8, %c0_9] : memref<16x1xf32, #tpu.memory_space<vmem>>, vector<16x1xf32>
    %16 = arith.maximumf %15, %14 : vector<16x1xf32>
    %c0_10 = arith.constant 0 : index
    %c0_11 = arith.constant 0 : index
    %17 = vector.load %arg7[%c0_10, %c0_11] : memref<16x1xf32, #tpu.memory_space<vmem>>, vector<16x1xf32>
    %c0_12 = arith.constant 0 : index
    %c0_13 = arith.constant 0 : index
    %18 = vector.load %arg6[%c0_12, %c0_13] : memref<16x1xf32, #tpu.memory_space<vmem>>, vector<16x1xf32>
    %19 = arith.subf %18, %16 : vector<16x1xf32>
    %20 = math.exp %19 : vector<16x1xf32>
    %21 = arith.mulf %17, %20 : vector<16x1xf32>
    %22 = vector.broadcast %16 : vector<16x1xf32> to vector<16x128xf32>
    %23 = arith.subf %8, %22 : vector<16x128xf32>
    %24 = math.exp %23 : vector<16x128xf32>
    %cst_14 = arith.constant dense<0.000000e+00> : vector<16xf32>
    %25 = vector.multi_reduction <add>, %24, %cst_14 [1] : vector<16x128xf32> to vector<16xf32>
    %26 = vector.shape_cast %25 : vector<16xf32> to vector<16x1xf32>
    %27 = arith.addf %21, %26 : vector<16x1xf32>
    %c0_15 = arith.constant 0 : index
    %c0_16 = arith.constant 0 : index
    %28 = vector.load %arg7[%c0_15, %c0_16] : memref<16x1xf32, #tpu.memory_space<vmem>>, vector<16x1xf32>
    tpu.vector_store %arg7[%c0_15, %c0_16], %27 {strides = array<i32>} : memref<16x1xf32, #tpu.memory_space<vmem>>, vector<16x1xf32>,
    %c0_17 = arith.constant 0 : index
    %c0_18 = arith.constant 0 : index
    %29 = vector.load %arg6[%c0_17, %c0_18] : memref<16x1xf32, #tpu.memory_space<vmem>>, vector<16x1xf32>
    tpu.vector_store %arg6[%c0_17, %c0_18], %16 {strides = array<i32>} : memref<16x1xf32, #tpu.memory_space<vmem>>, vector<16x1xf32>,
    %c3_i32 = arith.constant 3 : i32
    %30 = arith.cmpi eq, %arg1, %c3_i32 : i32
    %31 = arith.extui %30 : i1 to i32
    %c0_i32_19 = arith.constant 0 : i32
    %32 = arith.cmpi ne, %31, %c0_i32_19 : i32
    scf.if %32 {
      %c0_20 = arith.constant 0 : index
      %c0_21 = arith.constant 0 : index
      %33 = vector.load %arg6[%c0_20, %c0_21] : memref<16x1xf32, #tpu.memory_space<vmem>>, vector<16x1xf32>
      %c0_22 = arith.constant 0 : index
      %c0_23 = arith.constant 0 : index
      %34 = vector.load %arg7[%c0_22, %c0_23] : memref<16x1xf32, #tpu.memory_space<vmem>>, vector<16x1xf32>
      %35 = math.log %34 : vector<16x1xf32>
      %36 = arith.addf %33, %35 : vector<16x1xf32>
      %c0_24 = arith.constant 0 : index
      %c0_25 = arith.constant 0 : index
      %37 = vector.load %arg5[%c0_24, %c0_25] : memref<16x512xf32, #tpu.memory_space<vmem>>, vector<16x512xf32>
      %38 = vector.broadcast %36 : vector<16x1xf32> to vector<16x512xf32>
      %39 = arith.subf %37, %38 : vector<16x512xf32>
      %c0_26 = arith.constant 0 : index
      %c0_27 = arith.constant 0 : index
      %40 = vector.load %arg5[%c0_26, %c0_27] : memref<16x512xf32, #tpu.memory_space<vmem>>, vector<16x512xf32>
      tpu.vector_store %arg5[%c0_26, %c0_27], %39 {strides = array<i32>} : memref<16x512xf32, #tpu.memory_space<vmem>>, vector<16x512xf32>,
    } else {
    }
    return
  }
  func.func @transform_0(%arg0: i32, %arg1: i32) -> (i32, i32) {
    %c0_i32 = arith.constant 0 : i32
    %c0_i32_0 = arith.constant 0 : i32
    return %arg0, %c0_i32 : i32, i32
  }
  func.func @transform_1(%arg0: i32, %arg1: i32) -> (i32, i32) {
    %c0_i32 = arith.constant 0 : i32
    %c0_i32_0 = arith.constant 0 : i32
    return %c0_i32, %arg1 : i32, i32
  }
  func.func @transform_2(%arg0: i32, %arg1: i32) -> (i32, i32) {
    %c0_i32 = arith.constant 0 : i32
    %c0_i32_0 = arith.constant 0 : i32
    return %c0_i32, %arg1 : i32, i32
  }
  func.func @transform_3(%arg0: i32, %arg1: i32) -> (i32, i32) {
    %c0_i32 = arith.constant 0 : i32
    %c0_i32_0 = arith.constant 0 : i32
    return %arg0, %c0_i32 : i32, i32
  }
}

</mosaic_0001>

<llo_original>
// kernel: tpu_custom_call.1
$region0: #{tpu_custom_call.1}
  #allocation0 [shape = 'u32[]', space=smem, size = 0x4, offset = 0x4, fixed_abs, tag = 'smem constant byte address 0x4 - core index']
  #allocation1 [shape = 'u32[144,128]{1,0:T(1,128)}', space=vmem, size = 0x12000, scoped, tag = 'internal scratch']
  #allocation2 [shape = 'f32[16,1]{1,0:T(8,128)}', space=vmem, size = 0x2000, scoped, tag = 'scratch operand']
  #allocation3 [shape = 'f32[16,1]{1,0:T(8,128)}', space=vmem, size = 0x2000, scoped, tag = 'scratch operand']
  %s0 = inlined_call_operand.hbm [shape: bf16[16,32], index: 0, kind: input, shape index: {}]
  %s1 = inlined_call_operand.hbm [shape: bf16[32,512], index: 1, kind: input, shape index: {}]
  %s2 = inlined_call_operand.vmem [shape: f32[1,512], index: 2, kind: input, shape index: {}]
  %s3 = inlined_call_operand.hbm [shape: f32[16,512], index: 3, kind: output, shape index: {}]
  %s4 = sld [smem:[#allocation0]]
  $region61: #{tpu_custom_call.1} parent=0
    _
  %s6 = ssub.s32 1, %s4
  %s7 = scalar_select 0, %s6, %s4
  $region1: #{tpu_custom_call.1} parent=0
    #allocation4 [shape = 'u8[4096]{0}', space=vmem, size = 0x1000, scoped, tag = 'input window, operand 0, single buffered']
    #allocation5 [shape = 's32[2]{0}', space=sflag, size = 0x8, scoped, tag = 'scoped memory for tpu_custom_call.1']
    #allocation6 [shape = 's32[2]{0}', space=sflag, size = 0x8, scoped, tag = 'scoped memory for tpu_custom_call.1']
    #allocation7 [shape = 'u8[16384]{0}', space=vmem, size = 0x4000, scoped, tag = 'input window, operand 1']
    #allocation8 [shape = 's32[2]{0}', space=sflag, size = 0x8, scoped, tag = 'scoped memory for tpu_custom_call.1']
    #allocation9 [shape = 'u8[32768]{0}', space=vmem, size = 0x8000, scoped, tag = 'output window, operand 0, single buffered']
    %8 = vsyncpa [#allocation5], 0
    %9 = vsyncpa [#allocation8], 0
    %s10 = scalar_lea.sflag [#allocation8], 1
    %11 = vsyncpa %s10, 0
    %12 = vsyncpa [#allocation6], 0
    loop: start=0, step=1, limit=6
    $region2: #{tpu_custom_call.1} parent=1 // loop_pre_header
      _
    $region3: #{tpu_custom_call.1} parent=1 // loop_header
      %s14 = sphi 0, %s18
      %p15 = scmp.ge.s32.totalorder %s14, 6
      %s21 = sphi 0, %s33
      %s22 = sphi 0, %s29
      %s23 = sphi 0, %s21
      %s24 = sphi 0, %s22
      %s25 = sphi 0, %s23
      %s26 = sphi 0, %s24
      %s36 = sphi 0, %s38
      %s39 = sphi 0, %s36
      %s40 = sphi 0, %s39
      %s56 = sphi 0, %s40
      %s62 = sphi 0, %s64
      %s65 = sphi 0, %s62
      %s66 = sphi 0, %s65
      %s82 = sphi 0, %s66
      %s88 = sphi 0, %s90
      %s91 = sphi 0, %s88
      %s92 = sphi 0, %s91
      %s108 = sphi 0, %s92
      %s114 = sphi 0, %s116
      %s117 = sphi 0, %s114
      %s118 = sphi 0, %s117
      %s134 = sphi 0, %s118
    $region4: #{tpu_custom_call.1} parent=1 // loop_header_branch
      %17 = sbr.rel (%p15) target = $region8
    $region5: #{tpu_custom_call.1} parent=1 // loop_body
      %s19 = ssub.s32 %s14, 1
      %s20 = ssub.s32 %s14, 2
      %s27 = sadd.s32 1, %s22
      %p28 = scmp.ge.s32.totalorder %s27, 4
      %s29 = scalar_select %p28, 0, %s27
      %s30 = sadd.s32 1, %s21
      %s31 = scalar_select %p28, %s30, %s21
      %p32 = scmp.ge.s32.totalorder %s31, 1
      %s33 = scalar_select %p32, 0, %s31
      %s34 = ssub.s32 %s21, %s33
      %p35 = scmp.eq.s32.totalorder %s34, 0
      %s37 = sadd.s32 %s36, 1
      %s38 = scalar_select %p35, %s36, %s37
      %p41 = pneg %p35
      %p42 = scmp.eq.s32.totalorder %s14, 3
      %p43 = por %p41, %p42
      %p44 = scmp.ne.s32.totalorder %s36, %s39
      %p45 = scmp.eq.s32.totalorder %s14, 0
      %p46 = por %p44, %p45
      %p47 = scmp.ne.s32.totalorder %s36, %s39
      %p48 = scmp.eq.s32.totalorder %s19, 3
      %p49 = por %p47, %p48
      %p50 = scmp.ne.s32.totalorder %s39, %s40
      %p51 = scmp.eq.s32.totalorder %s19, 0
      %p52 = por %p50, %p51
      %p53 = scmp.ne.s32.totalorder %s39, %s40
      %p54 = scmp.eq.s32.totalorder %s20, 3
      %p55 = por %p53, %p54
      %p57 = scmp.ne.s32.totalorder %s40, %s56
      %p58 = scmp.eq.s32.totalorder %s20, 0
      %p59 = por %p57, %p58
      %s60 = ssub.s32 %s22, %s29
      %p61 = scmp.eq.s32.totalorder %s60, 0
      %s63 = sadd.s32 %s62, 1
      %s64 = scalar_select %p61, %s62, %s63
      %p67 = pneg %p61
      %p68 = scmp.eq.s32.totalorder %s14, 3
      %p69 = por %p67, %p68
      %p70 = scmp.ne.s32.totalorder %s62, %s65
      %p71 = scmp.eq.s32.totalorder %s14, 0
      %p72 = por %p70, %p71
      %p73 = scmp.ne.s32.totalorder %s62, %s65
      %p74 = scmp.eq.s32.totalorder %s19, 3
      %p75 = por %p73, %p74
      %p76 = scmp.ne.s32.totalorder %s65, %s66
      %p77 = scmp.eq.s32.totalorder %s19, 0
      %p78 = por %p76, %p77
      %p79 = scmp.ne.s32.totalorder %s65, %s66
      %p80 = scmp.eq.s32.totalorder %s20, 3
      %p81 = por %p79, %p80
      %p83 = scmp.ne.s32.totalorder %s66, %s82
      %p84 = scmp.eq.s32.totalorder %s20, 0
      %p85 = por %p83, %p84
      %s86 = ssub.s32 %s22, %s29
      %p87 = scmp.eq.s32.totalorder %s86, 0
      %s89 = sadd.s32 %s88, 1
      %s90 = scalar_select %p87, %s88, %s89
      %p93 = pneg %p87
      %p94 = scmp.eq.s32.totalorder %s14, 3
      %p95 = por %p93, %p94
      %p96 = scmp.ne.s32.totalorder %s88, %s91
      %p97 = scmp.eq.s32.totalorder %s14, 0
      %p98 = por %p96, %p97
      %p99 = scmp.ne.s32.totalorder %s88, %s91
      %p100 = scmp.eq.s32.totalorder %s19, 3
      %p101 = por %p99, %p100
      %p102 = scmp.ne.s32.totalorder %s91, %s92
      %p103 = scmp.eq.s32.totalorder %s19, 0
      %p104 = por %p102, %p103
      %p105 = scmp.ne.s32.totalorder %s91, %s92
      %p106 = scmp.eq.s32.totalorder %s20, 3
      %p107 = por %p105, %p106
      %p109 = scmp.ne.s32.totalorder %s92, %s108
      %p110 = scmp.eq.s32.totalorder %s20, 0
      %p111 = por %p109, %p110
      %s112 = ssub.s32 %s21, %s33
      %p113 = scmp.eq.s32.totalorder %s112, 0
      %s115 = sadd.s32 %s114, 1
      %s116 = scalar_select %p113, %s114, %s115
      %p119 = pneg %p113
      %p120 = scmp.eq.s32.totalorder %s14, 3
      %p121 = por %p119, %p120
      %p122 = scmp.ne.s32.totalorder %s114, %s117
      %p123 = scmp.eq.s32.totalorder %s14, 0
      %p124 = por %p122, %p123
      %p125 = scmp.ne.s32.totalorder %s114, %s117
      %p126 = scmp.eq.s32.totalorder %s19, 3
      %p127 = por %p125, %p126
      %p128 = scmp.ne.s32.totalorder %s117, %s118
      %p129 = scmp.eq.s32.totalorder %s19, 0
      %p130 = por %p128, %p129
      %p131 = scmp.ne.s32.totalorder %s117, %s118
      %p132 = scmp.eq.s32.totalorder %s20, 3
      %p133 = por %p131, %p132
      %p135 = scmp.ne.s32.totalorder %s118, %s134
      %p136 = scmp.eq.s32.totalorder %s20, 0
      %p137 = por %p135, %p136
      %p138 = scmp.le.s32.totalorder 1, %s14
      %p139 = scmp.lt.s32.totalorder %s14, 5
      %p140 = pnand %p138, %p139
      %p141 = pneg %p140
      // Predicated region
      $region9: #{tpu_custom_call.1} parent=5 // pred_check
        _
      $region10: #{tpu_custom_call.1} parent=5 // pred_check_branch
        %143 = sbr.rel (%p140) target = $region12
      $region11: #{tpu_custom_call.1} parent=5 // pred_region
        %s144 = ssub.s32 %s14, 1
        // Predicated region
        $region13: #{tpu_custom_call.1} parent=11 // pred_check
          %p145 = pneg %p52
        $region14: #{tpu_custom_call.1} parent=11 // pred_check_branch
          %147 = sbr.rel (%p145) target = $region16
        $region15: #{tpu_custom_call.1} parent=11 // pred_region
          %s148 = smul.u32 2, %s23
          %s150 = ssub.s32 128, 128
          %151 = vsyncadd [#allocation5], %s150
          %s152 = smul.addr %s148, 64
          %s153 = scalar_lea.hbm %s0, %s152
          %s154 = sshll.u32 [#allocation4], 4
          %s155 = int_to_ptr.vmem [resolvable:$true] %s154
          %160 = dma.hbm_to_vmem [thread:$0]  %s153, 128, %s155, [#allocation5], 64, 64, 4
        $region16: #{tpu_custom_call.1} parent=11 // pred_fallthru
          _
      $region12: #{tpu_custom_call.1} parent=5 // pred_fallthru
        _
      %p161 = scmp.lt.s32.totalorder %s14, 4
      // Predicated region
      $region17: #{tpu_custom_call.1} parent=5 // pred_check
        %p162 = pneg %p161
      $region18: #{tpu_custom_call.1} parent=5 // pred_check_branch
        %164 = sbr.rel (%p162) target = $region20
      $region19: #{tpu_custom_call.1} parent=5 // pred_region
        // Predicated region
        $region21: #{tpu_custom_call.1} parent=19 // pred_check
          %p165 = pneg %p72
        $region22: #{tpu_custom_call.1} parent=19 // pred_check_branch
          %167 = sbr.rel (%p165) target = $region24
        $region23: #{tpu_custom_call.1} parent=19 // pred_region
          %s168 = sand.u32 %s62, 1
          %s169 = scalar_lea.sflag [#allocation8], %s168
          %s170 = sand.u32 %s62, 1
          %s171 = smul.addr %s170, 16
          %s172 = scalar_lea.vmem [#allocation7], %s171
          %s174 = ssub.s32 256, 256
          %175 = vsyncadd %s169, %s174
          %s176 = smul.addr %s22, 64
          %s177 = scalar_lea.hbm %s1, %s176
          %s178 = sshll.u32 %s172, 4
          %s179 = int_to_ptr.vmem [resolvable:$true] %s178
          %184 = dma.hbm_to_vmem [thread:$0]  %s177, 256, %s179, %s169, 256, 64, 4
        $region24: #{tpu_custom_call.1} parent=19 // pred_fallthru
          _
        // Predicated region
        $region25: #{tpu_custom_call.1} parent=19 // pred_check
          %p185 = pneg %p98
        $region26: #{tpu_custom_call.1} parent=19 // pred_check_branch
          %187 = sbr.rel (%p185) target = $region28
        $region27: #{tpu_custom_call.1} parent=19 // pred_region
          %p188 = scmp.lt.s32.totalorder %s22, 3
          %s189 = scalar_select %p188, %s22, 3
          %s190 = scalar_lea.vmem %s2, %s189
        $region28: #{tpu_custom_call.1} parent=19 // pred_fallthru
          _
      $region20: #{tpu_custom_call.1} parent=5 // pred_fallthru
        _
      %p191 = scmp.le.s32.totalorder 1, %s14
      %p192 = scmp.lt.s32.totalorder %s14, 5
      %p193 = pnand %p191, %p192
      %p194 = pneg %p193
      // Predicated region
      $region29: #{tpu_custom_call.1} parent=5 // pred_check
        _
      $region30: #{tpu_custom_call.1} parent=5 // pred_check_branch
        %196 = sbr.rel (%p193) target = $region32
      $region31: #{tpu_custom_call.1} parent=5 // pred_region
        %s197 = ssub.s32 %s14, 1
        // Predicated region
        $region33: #{tpu_custom_call.1} parent=31 // pred_check
          %p198 = pneg %p52
        $region34: #{tpu_custom_call.1} parent=31 // pred_check_branch
          %200 = sbr.rel (%p198) target = $region36
        $region35: #{tpu_custom_call.1} parent=31 // pred_region
          %201 = dma.done [#allocation5], 128
        $region36: #{tpu_custom_call.1} parent=31 // pred_fallthru
          _
        %s202 = sand.u32 %s65, 1
        %s203 = scalar_lea.sflag [#allocation8], %s202
        %s204 = sand.u32 %s65, 1
        %s205 = smul.addr %s204, 16
        %s206 = scalar_lea.vmem [#allocation7], %s205
        // Predicated region
        $region37: #{tpu_custom_call.1} parent=31 // pred_check
          %p207 = pneg %p78
        $region38: #{tpu_custom_call.1} parent=31 // pred_check_branch
          %209 = sbr.rel (%p207) target = $region40
        $region39: #{tpu_custom_call.1} parent=31 // pred_region
          %210 = dma.done %s203, 256
        $region40: #{tpu_custom_call.1} parent=31 // pred_fallthru
          _
        %p211 = pneg %p52
        %p212 = pneg %p49
        %s213 = sand.u32 %s65, 1
        %s214 = scalar_lea.sflag [#allocation8], %s213
        %s215 = sand.u32 %s65, 1
        %s216 = smul.addr %s215, 16
        %s217 = scalar_lea.vmem [#allocation7], %s216
        %p218 = pneg %p78
        %p219 = pneg %p75
        %p220 = scmp.lt.s32.totalorder %s24, 3
        %s221 = scalar_select %p220, %s24, 3
        %s222 = scalar_lea.vmem %s2, %s221
        %p223 = pneg %p104
        %p224 = pneg %p101
        %p225 = pneg %p130
        %p226 = pneg %p127
        %s227 = smul.u32 2, %s23
        %p228 = scmp.lt.s32.totalorder %s24, 3
        %s229 = scalar_select %p228, %s24, 3
        %s230 = scalar_lea.vmem %s2, %s229
        %s231 = smul.u32 2, %s23
        %p233 = scmp.eq.s32.totalorder %s24, 0
        // Predicated region
        $region41: #{tpu_custom_call.1} parent=31 // pred_check
          %p234 = pneg %p233
        $region42: #{tpu_custom_call.1} parent=31 // pred_check_branch
          %236 = sbr.rel (%p234) target = $region44
        $region43: #{tpu_custom_call.1} parent=31 // pred_region
          %vm237 = vcmask 7168
          %238 = vst.msk [vmem:[#allocation2] sm:$0xff] %vm237, -inf
          %239 = vst.msk [vmem:[#allocation2 + $0x8] sm:$0xff] %vm237, -inf
          %240 = vst.msk [vmem:[#allocation3] sm:$0xff] %vm237, 0.0
          %241 = vst.msk [vmem:[#allocation3 + $0x8] sm:$0xff] %vm237, 0.0
        $region44: #{tpu_custom_call.1} parent=31 // pred_fallthru
          _
        %v242 = vld [vmem:[#allocation4] sm:$0xf]
        %v243 = vld [vmem:[#allocation4 + $0x4] sm:$0xf]
        %v244 = vld [vmem:[%s206] sm:$0xf]
        %v245 = vld [vmem:[%s206 + $0x4] sm:$0xf]
        %v246 = vld [vmem:[%s206 + $0x8] sm:$0xf]
        %v247 = vld [vmem:[%s206 + $0xc] sm:$0xf]
        %v248 = vld [vmem:[%s230] sm:$0x1]
        %v250 = vlaneseq
        %v251 = vshrl.u32 %v250, 7
        %v252 = vsub.s32 0, %v251
        %v253 = vrot.slane %v248, %v252
        %v257 = vunpack.c.l.b16 %v242
        %v258 = vunpack.c.l.b16 %v243
        %v259 = vpack.c.b16 %v258, %v257
        %v264 = vunpack.c.l.b16 %v244
        %v265 = vunpack.c.l.b16 %v245
        %v266 = vunpack.c.l.b16 %v246
        %v267 = vunpack.c.l.b16 %v247
        %v268 = vpack.c.b16 %v265, %v264
        %v269 = vpack.c.b16 %v267, %v266
        %vm272 = vcmask 261120
        %v274 = vsel %vm272, %v259, 0
        %276 = vmatprep.subr.bf16.mxu0 0
        %277 = vmatpush1.bf16.msra.mxu0 %v268
        %278 = vmatprep.subr.bf16.mxu0 0
        %279 = vmatpush1.bf16.msra.mxu0 %v269
        %280 = vmatprep.subr.bf16.mxu0 0
        %281 = vmatpush1.bf16.msra.mxu0 0
        %282 = vmatprep.subr.bf16.mxu0 0
        %283 = vmatpush1.bf16.msra.mxu0 0
        %284 = vmatprep.subr.bf16.mxu0 0
        %285 = vmatpush1.bf16.msra.mxu0 0
        %286 = vmatprep.subr.bf16.mxu0 0
        %287 = vmatpush1.bf16.msra.mxu0 0
        %288 = vmatprep.subr.bf16.mxu0 0
        %289 = vmatpush1.bf16.msra.mxu0 0
        %290 = vmatprep.subr.bf16.mxu0 0
        %291 = vmatpush1.bf16.msra.mxu0 0
        %292 = vmatprep.subr.bf16.mxu0 0
        %293 = vmatpush1.bf16.msra.mxu0 0
        %294 = vmatprep.subr.bf16.mxu0 0
        %295 = vmatpush1.bf16.msra.mxu0 0
        %296 = vmatprep.subr.bf16.mxu0 0
        %297 = vmatpush1.bf16.msra.mxu0 0
        %298 = vmatprep.subr.bf16.mxu0 0
        %299 = vmatpush1.bf16.msra.mxu0 0
        %300 = vmatprep.subr.bf16.mxu0 0
        %301 = vmatpush1.bf16.msra.mxu0 0
        %302 = vmatprep.subr.bf16.mxu0 0
        %303 = vmatpush1.bf16.msra.mxu0 0
        %304 = vmatprep.subr.bf16.mxu0 0
        %305 = vmatpush1.bf16.msra.mxu0 0
        %306 = vmatprep.subr.bf16.mxu0 0
        %307 = vmatpush1.bf16.msra.mxu0 0
        %308 = vmatprep.mubr.bf16.mxu0 0
        %309 = vmatmul.mubr.bf16.gmra.mrb[0].mxu0 %v274
        %v310 = vpop.f32.mrb[0].mxu0
        %v311 = vadd.f32 %v253, %v310
        %v312 = vpop.f32.mrb[0].mxu0
        %v313 = vpop.f32.mrb[0].mxu0
        %v314 = vadd.f32 %v253, %v313
        %v315 = vpop.f32.mrb[0].mxu0
        %316 = vdwg.mxu0
        %s317 = smul.u32 %s24, 128
        %s318 = sshra.s32 %s317, 7
        %s319 = sand.u32 %s317, 127
        %s320 = smul.addr %s318, 8
        %s321 = scalar_lea.vmem [#allocation9], %s320
        %322 = vst [vmem:[%s321] sm:$0xff] %v311
        %323 = vst [vmem:[%s321 + $0x20] sm:$0xff] %v314
        %324 = vmax.xlane.f32.xlu0 %v311
        %v325 = vpop.xlane.xlu0 %324
        %326 = vmax.xlane.f32.xlu0 %v314
        %v327 = vpop.xlane.xlu0 %326
        %v328 = vld [vmem:[#allocation2] sm:$0xff]
        %v329 = vld [vmem:[#allocation2 + $0x8] sm:$0xff]
        %v330 = vmax.f32 %v328, %v325
        %v331 = vmax.f32 %v329, %v327
        %v332 = vld [vmem:[#allocation3] sm:$0xff]
        %v333 = vld [vmem:[#allocation3 + $0x8] sm:$0xff]
        %v334 = vsub.f32 %v328, %v330
        %v335 = vsub.f32 %v329, %v331
        %v336 = vmul.f32 %v334, 1.442695
        %v337 = vpow.pop %v336
        %v338 = vmul.f32 %v335, 1.442695
        %v339 = vpow.pop %v338
        %v340 = vmul.f32 %v332, %v337
        %v341 = vmul.f32 %v333, %v339
        %343 = vset.pattern.permute.xlu0 0
        %344 = vperm.xlu0 %343, %v330
        %v345 = vpop.permute.xlu0 %344
        %348 = vset.pattern.permute.xlu0 0
        %349 = vperm.xlu0 %348, %v331
        %v350 = vpop.permute.xlu0 %349
        %v352 = vsub.f32 %v311, %v345
        %v353 = vsub.f32 %v314, %v350
        %v354 = vmul.f32 %v352, 1.442695
        %v355 = vpow.pop %v354
        %v356 = vmul.f32 %v353, 1.442695
        %v357 = vpow.pop %v356
        %358 = vadd.xlane.f32.xlu0 %v355
        %v359 = vpop.xlane.xlu0 %358
        %360 = vadd.xlane.f32.xlu0 %v357
        %v361 = vpop.xlane.xlu0 %360
        %v362 = vadd.f32 %v340, %v359
        %v363 = vadd.f32 %v341, %v361
        %vm364 = vcmask 7168
        %365 = vst.msk [vmem:[#allocation3] sm:$0xff] %vm364, %v362
        %366 = vst.msk [vmem:[#allocation3 + $0x8] sm:$0xff] %vm364, %v363
        %367 = vst.msk [vmem:[#allocation2] sm:$0xff] %vm364, %v330
        %368 = vst.msk [vmem:[#allocation2 + $0x8] sm:$0xff] %vm364, %v331
        %p369 = scmp.eq.s32.totalorder %s24, 3
        // Predicated region
        $region45: #{tpu_custom_call.1} parent=31 // pred_check
          %p370 = pneg %p369
        $region46: #{tpu_custom_call.1} parent=31 // pred_check_branch
          %372 = sbr.rel (%p370) target = $region48
        $region47: #{tpu_custom_call.1} parent=31 // pred_region
          %v373 = vld [vmem:[#allocation2] sm:$0xff]
          %v374 = vld [vmem:[#allocation2 + $0x8] sm:$0xff]
          %v375 = vld [vmem:[#allocation3] sm:$0xff]
          %v376 = vld [vmem:[#allocation3 + $0x8] sm:$0xff]
          %v377 = vlog2.pop %v375
          %v378 = vmul.f32 %v377, 0.6931472
          %v379 = vlog2.pop %v376
          %v380 = vmul.f32 %v379, 0.6931472
          %v381 = vadd.f32 %v373, %v378
          %v382 = vadd.f32 %v374, %v380
          %v383 = vld [vmem:[#allocation9] sm:$0xff]
          %v384 = vld [vmem:[#allocation9 + $0x8] sm:$0xff]
          %v385 = vld [vmem:[#allocation9 + $0x10] sm:$0xff]
          %v386 = vld [vmem:[#allocation9 + $0x18] sm:$0xff]
          %v387 = vld [vmem:[#allocation9 + $0x20] sm:$0xff]
          %v388 = vld [vmem:[#allocation9 + $0x28] sm:$0xff]
          %v389 = vld [vmem:[#allocation9 + $0x30] sm:$0xff]
          %v390 = vld [vmem:[#allocation9 + $0x38] sm:$0xff]
          %392 = vset.pattern.permute.xlu0 0
          %393 = vperm.xlu0 %392, %v381
          %v394 = vpop.permute.xlu0 %393
          %397 = vset.pattern.permute.xlu0 0
          %398 = vperm.xlu0 %397, %v382
          %v399 = vpop.permute.xlu0 %398
          %v401 = vsub.f32 %v383, %v394
          %v402 = vsub.f32 %v384, %v394
          %v403 = vsub.f32 %v385, %v394
          %v404 = vsub.f32 %v386, %v394
          %v405 = vsub.f32 %v387, %v399
          %v406 = vsub.f32 %v388, %v399
          %v407 = vsub.f32 %v389, %v399
          %v408 = vsub.f32 %v390, %v399
          %409 = vst [vmem:[#allocation9] sm:$0xff] %v401
          %410 = vst [vmem:[#allocation9 + $0x8] sm:$0xff] %v402
          %411 = vst [vmem:[#allocation9 + $0x10] sm:$0xff] %v403
          %412 = vst [vmem:[#allocation9 + $0x18] sm:$0xff] %v404
          %413 = vst [vmem:[#allocation9 + $0x20] sm:$0xff] %v405
          %414 = vst [vmem:[#allocation9 + $0x28] sm:$0xff] %v406
          %415 = vst [vmem:[#allocation9 + $0x30] sm:$0xff] %v407
          %416 = vst [vmem:[#allocation9 + $0x38] sm:$0xff] %v408
        $region48: #{tpu_custom_call.1} parent=31 // pred_fallthru
          _
        // Predicated region
        $region49: #{tpu_custom_call.1} parent=31 // pred_check
          %p417 = pneg %p127
        $region50: #{tpu_custom_call.1} parent=31 // pred_check_branch
          %419 = sbr.rel (%p417) target = $region52
        $region51: #{tpu_custom_call.1} parent=31 // pred_region
          %s420 = smul.u32 2, %s23
          %s422 = ssub.s32 1024, 1024
          %423 = vsyncadd [#allocation6], %s422
          %s424 = smul.addr %s420, 4
          %s425 = smul.addr %s424, 128
          %s426 = scalar_lea.hbm %s3, %s425
          %s427 = sshll.u32 [#allocation9], 4
          %s428 = int_to_ptr.vmem [resolvable:$true] %s427
          %433 = dma.vmem_to_hbm [thread:$0]  %s428, 1024, %s426, [#allocation6], 512, 512, 32
        $region52: #{tpu_custom_call.1} parent=31 // pred_fallthru
          _
        // Predicated region
        $region53: #{tpu_custom_call.1} parent=31 // pred_check
          %p434 = pneg %p127
        $region54: #{tpu_custom_call.1} parent=31 // pred_check_branch
          %436 = sbr.rel (%p434) target = $region56
        $region55: #{tpu_custom_call.1} parent=31 // pred_region
          %437 = dma.done [#allocation6], 1024
        $region56: #{tpu_custom_call.1} parent=31 // pred_fallthru
          _
      $region32: #{tpu_custom_call.1} parent=5 // pred_fallthru
        _
      %p438 = scmp.le.s32.totalorder 2, %s14
      // Predicated region
      $region57: #{tpu_custom_call.1} parent=5 // pred_check
        %p439 = pneg %p438
      $region58: #{tpu_custom_call.1} parent=5 // pred_check_branch
        %441 = sbr.rel (%p439) target = $region60
      $region59: #{tpu_custom_call.1} parent=5 // pred_region
        %s442 = ssub.s32 %s14, 2
      $region60: #{tpu_custom_call.1} parent=5 // pred_fallthru
        _
    $region6: #{tpu_custom_call.1} parent=1 // loop_footer
      %s18 = sadd.s32 1, %s14
    $region7: #{tpu_custom_call.1} parent=1 // loop_footer_branch
      %13 = sbr.rel target = $region3
    $region8: #{tpu_custom_call.1} parent=1 // loop_exit
      _
    %443 = vsyncpa [#allocation5], 1
    %s444 = scalar_lea.sflag [#allocation5], 1
    %445 = vsyncpa %s444, 1
    %446 = vsyncpa [#allocation8], 1
    %s447 = scalar_lea.sflag [#allocation8], 1
    %448 = vsyncpa %s447, 1
    %449 = vsyncpa [#allocation6], 1
    %s450 = scalar_lea.sflag [#allocation6], 1
    %451 = vsyncpa %s450, 1

</llo_original>
